<compile_context>
chip_gen: v7x
topology: tpu7x:2x2x1
jax: 0.10.0
libtpu: 0.0.40
codegen_flags: <defaults>
</compile_context>

<pallas_src>
import jax
import jax.numpy as jnp
from jax import lax
from jax.experimental import pallas as pl
from jax.experimental.pallas import tpu as pltpu

LPAD = 128  # lane padding for the latent dimension


# --------------------------------------------------------------------------
# Kernel A: encoder (K-streamed) -> fused mu/logsigma -> reparam -> dec 1&2
# --------------------------------------------------------------------------
def _enc_dec_kernel(x_ref, w1_ref, b1_ref, w2_ref, b2_ref,
                    wmuls_ref, bmuls_ref, eps_ref,
                    wd1_ref, bd1_ref, wd2_ref, bd2_ref,
                    zstats_ref, d2_ref, h1_acc):
    k = pl.program_id(0)

    @pl.when(k == 0)
    def _init():
        h1_acc[...] = jnp.zeros_like(h1_acc)

    # Encoder layer 1, streamed: accumulate x_tile @ w1_tile over the K axis.
    h1_acc[...] += jnp.dot(x_ref[...].astype(jnp.bfloat16), w1_ref[...],
                           preferred_element_type=jnp.float32)

    @pl.when(k == pl.num_programs(0) - 1)
    def _finalize():
        h1 = jnp.maximum(h1_acc[...] + b1_ref[...], 0.0)
        h2 = jnp.dot(h1.astype(jnp.bfloat16), w2_ref[...],
                     preferred_element_type=jnp.float32) + b2_ref[...]
        h2 = jnp.maximum(h2, 0.0)

        # Fused (mu | logsigma) projection, lane-padded to 2*LPAD columns.
        zstats = jnp.dot(h2.astype(jnp.bfloat16), wmuls_ref[...],
                         preferred_element_type=jnp.float32) + bmuls_ref[...]
        zstats_ref[...] = zstats

        z_mu = zstats[:, :LPAD]
        z_ls = zstats[:, LPAD:]
        # eps is zero on padded lanes/rows, so padded z columns stay zero.
        z = z_mu + jnp.exp(z_ls) * eps_ref[...]

        d1 = jnp.dot(z.astype(jnp.bfloat16), wd1_ref[...],
                     preferred_element_type=jnp.float32) + bd1_ref[...]
        d1 = jnp.maximum(d1, 0.0)
        d2 = jnp.dot(d1.astype(jnp.bfloat16), wd2_ref[...],
                     preferred_element_type=jnp.float32) + bd2_ref[...]
        d2_ref[...] = jnp.maximum(d2, 0.0)


# --------------------------------------------------------------------------
# Kernel B: final decoder matmul (seq-tiled) fused with log_softmax / logpx_z
# --------------------------------------------------------------------------
def _dec_softmax_kernel(d2_ref, w3_ref, b3_ref, x_ref, xhat_ref, lp_ref):
    st = w3_ref.shape[0]
    d2 = d2_ref[...].astype(jnp.bfloat16)                    # (Bp, A2)
    d2b = jnp.broadcast_to(d2, (st,) + d2.shape)             # (ST, Bp, A2)
    # Batched MXU matmul: (ST, Bp, A2) x (ST, A2, V) -> (ST, Bp, V) logits.
    logits = lax.dot_general(
        d2b, w3_ref[...],
        dimension_numbers=(((2,), (1,)), ((0,), (0,))),
        preferred_element_type=jnp.float32) + b3_ref[...]

    # log_softmax over the vocab (lane) axis: single exp pass + EUP reciprocal.
    m = jnp.max(logits, axis=-1, keepdims=True)
    shifted = logits - m
    p = jnp.exp(shifted)
    s = jnp.sum(p, axis=-1, keepdims=True)
    xhat_ref[...] = p * pl.reciprocal(s, approx=True)
    log_sm = shifted - jnp.log(s)
    # logpx_z = sum(x * log_softmax(decoder logits)) — per-tile partial sum
    # over this tile's sequence positions; the wrapper reduces across tiles.
    lp_ref[...] = jnp.sum(x_ref[...] * log_sm, axis=0, keepdims=True)


# --------------------------------------------------------------------------
# Wrapper
# --------------------------------------------------------------------------
def deep_sequence_simple_forward(x, eps, params, *, tk=128, st=8):
    """Forward pass of deepSequenceSimple (iwae=False). x: (B, S, V) float32."""
    B, S, V = x.shape
    D = S * V
    L = params["wmu"].shape[1]
    H1 = params["w1"].shape[1]
    H2 = params["w2"].shape[1]
    A1 = params["wd1"].shape[1]
    A2 = params["wd2"].shape[1]

    Bp = -(-B // 8) * 8                 # pad batch to a multiple of 8 sublanes
    if D % tk != 0:
        tk = D                          # fallback: single K tile
    if S % st != 0:
        st = S                          # fallback: single seq tile
    kt = D // tk
    nj = S // st

    f32, bf16 = jnp.float32, jnp.bfloat16

    # ---- layout / padding prep (wrapper-side glue) ----
    x2p = jnp.zeros((Bp, D), f32).at[:B].set(x.reshape(B, D))
    xsbv = jnp.zeros((S, Bp, V), f32).at[:, :B, :].set(jnp.transpose(x, (1, 0, 2)))
    epsp = jnp.zeros((Bp, LPAD), f32).at[:B, :L].set(eps)

    wmuls = jnp.zeros((H2, 2 * LPAD), f32)
    wmuls = wmuls.at[:, :L].set(params["wmu"].astype(f32))
    wmuls = wmuls.at[:, LPAD:LPAD + L].set(params["wls"].astype(f32)).astype(bf16)
    bmuls = jnp.zeros((1, 2 * LPAD), f32)
    bmuls = bmuls.at[:, :L].set(params["bmu"]).at[:, LPAD:LPAD + L].set(params["bls"])

    wd1p = jnp.zeros((LPAD, A1), f32).at[:L, :].set(params["wd1"].astype(f32)).astype(bf16)

    # Final decoder weight reorganized to (S, A2, V) so softmax sees V on lanes.
    w3r = params["wd3"].reshape(A2, S, V).transpose(1, 0, 2)          # bf16
    b3r = params["bd3"].reshape(S, V)[:, None, :]                     # (S, 1, V) f32

    # ---- Kernel A: encoder + reparam + decoder layers 1&2 ----
    zstats, d2 = pl.pallas_call(
        _enc_dec_kernel,
        grid=(kt,),
        in_specs=[
            pl.BlockSpec((Bp, tk), lambda k: (0, k)),         # x (K-tiled)
            pl.BlockSpec((tk, H1), lambda k: (k, 0)),         # w1 (streamed)
            pl.BlockSpec((1, H1), lambda k: (0, 0)),          # b1
            pl.BlockSpec((H1, H2), lambda k: (0, 0)),         # w2
            pl.BlockSpec((1, H2), lambda k: (0, 0)),          # b2
            pl.BlockSpec((H2, 2 * LPAD), lambda k: (0, 0)),   # wmu|wls fused
            pl.BlockSpec((1, 2 * LPAD), lambda k: (0, 0)),    # bmu|bls fused
            pl.BlockSpec((Bp, LPAD), lambda k: (0, 0)),       # eps (padded)
            pl.BlockSpec((LPAD, A1), lambda k: (0, 0)),       # wd1 (L padded)
            pl.BlockSpec((1, A1), lambda k: (0, 0)),          # bd1
            pl.BlockSpec((A1, A2), lambda k: (0, 0)),         # wd2
            pl.BlockSpec((1, A2), lambda k: (0, 0)),          # bd2
        ],
        out_specs=(
            pl.BlockSpec((Bp, 2 * LPAD), lambda k: (0, 0)),   # z-stats (mu|logsig)
            pl.BlockSpec((Bp, A2), lambda k: (0, 0)),         # decoder hidden d2
        ),
        out_shape=(
            jax.ShapeDtypeStruct((Bp, 2 * LPAD), jnp.float32),
            jax.ShapeDtypeStruct((Bp, A2), jnp.float32),
        ),
        scratch_shapes=[pltpu.VMEM((Bp, H1), jnp.float32)],
        compiler_params=pltpu.CompilerParams(
            dimension_semantics=("arbitrary",),               # K is a reduction
            vmem_limit_bytes=48 * 1024 * 1024),
    )(x2p, params["w1"], params["b1"], params["w2"], params["b2"],
      wmuls, bmuls, epsp, wd1p, params["bd1"], params["wd2"], params["bd2"])

    # ---- Kernel B: final decoder layer fused with softmax / logpx epilogue ----
    xhat_sbv, lp_part = pl.pallas_call(
        _dec_softmax_kernel,
        grid=(nj,),
        in_specs=[
            pl.BlockSpec((Bp, A2), lambda j: (0, 0)),         # d2 (resident)
            pl.BlockSpec((st, A2, V), lambda j: (j, 0, 0)),   # wd3 tiles (streamed)
            pl.BlockSpec((st, 1, V), lambda j: (j, 0, 0)),    # bd3 tiles
            pl.BlockSpec((st, Bp, V), lambda j: (j, 0, 0)),   # x tiles
        ],
        out_specs=(
            pl.BlockSpec((st, Bp, V), lambda j: (j, 0, 0)),   # x_hat tiles
            pl.BlockSpec((1, Bp, V), lambda j: (j, 0, 0)),    # logpx partials
        ),
        out_shape=(
            jax.ShapeDtypeStruct((S, Bp, V), jnp.float32),
            jax.ShapeDtypeStruct((nj, Bp, V), jnp.float32),
        ),
        compiler_params=pltpu.CompilerParams(
            dimension_semantics=("parallel",),                # seq tiles independent
            vmem_limit_bytes=48 * 1024 * 1024),
    )(d2, w3r, b3r, xsbv)

    x_hat = jnp.transpose(xhat_sbv, (1, 0, 2))[:B]            # (B, S, V)
    logpx_z = jnp.sum(lp_part, axis=(0, 2))[:B]               # (B,)
    z_mu = zstats[:B, :L]
    z_logsigma = zstats[:B, LPAD:LPAD + L]
    return {"x_hat": x_hat, "logpx_z": logpx_z,
            "z_mu": z_mu, "z_logsigma": z_logsigma}


# --------------------------------------------------------------------------
# Deterministic parameters (PyTorch Linear-style uniform init).
# Weights are (in, out) and stored in bf16; biases stay f32 with shape (1, out).
# --------------------------------------------------------------------------
def init_params(key, D, enc_h1, enc_h2, L, dec_a1, dec_a2):
    def linear(k, fin, fout):
        kw, kb = jax.random.split(k)
        bound = 1.0 / jnp.sqrt(jnp.float32(fin))
        w = jax.random.uniform(kw, (fin, fout), jnp.float32, -bound, bound)
        b = jax.random.uniform(kb, (1, fout), jnp.float32, -bound, bound)
        return w.astype(jnp.bfloat16), b

    keys = jax.random.split(key, 7)
    p = {}
    p["w1"], p["b1"] = linear(keys[0], D, enc_h1)          # Encoder Linear 1
    p["w2"], p["b2"] = linear(keys[1], enc_h1, enc_h2)     # Encoder Linear 2
    p["wmu"], p["bmu"] = linear(keys[2], enc_h2, L)        # l_mu
    p["wls"], p["bls"] = linear(keys[3], enc_h2, L)        # l_logsigma
    p["wd1"], p["bd1"] = linear(keys[4], L, dec_a1)        # Decoder Linear 1
    p["wd2"], p["bd2"] = linear(keys[5], dec_a1, dec_a2)   # Decoder Linear 2
    p["wd3"], p["bd3"] = linear(keys[6], dec_a2, D)        # Decoder Linear 3
    return p


# Pure-JAX reference (same bf16 weights / f32 accumulation) for a sanity check.
def reference_forward(x, eps, params):
    B, S, V = x.shape
    xf = x.reshape(B, S * V)

    def lin(a, w, b):
        return jnp.dot(a.astype(jnp.bfloat16), w,
                       preferred_element_type=jnp.float32) + b

    h = jax.nn.relu(lin(xf, params["w1"], params["b1"]))
    h = jax.nn.relu(lin(h, params["w2"], params["b2"]))
    z_mu = lin(h, params["wmu"], params["bmu"])
    z_ls = lin(h, params["wls"], params["bls"])
    z = z_mu + jnp.exp(z_ls) * eps
    d = jax.nn.relu(lin(z, params["wd1"], params["bd1"]))
    d = jax.nn.relu(lin(d, params["wd2"], params["bd2"]))
    logits = lin(d, params["wd3"], params["bd3"]).reshape(B, S, V)
    log_sm = jax.nn.log_softmax(logits, axis=2)
    return {"x_hat": jnp.exp(log_sm),
            "logpx_z": jnp.sum(x * log_sm, axis=(1, 2)),
            "z_mu": z_mu, "z_logsigma": z_ls}


if __name__ == "__main__":
    # Small shapes consistent with the module: x is (batch, seq, vocab).
    # (Original: seq=263, vocab=23, encoder [6049,1500,1500], decoder [100,2000,6049].)
    B, S, V = 4, 16, 16
    D = S * V
    L = 2                       # n_latent (default)
    ENC_H1, ENC_H2 = 128, 128   # scaled-down encoder_arch
    DEC_A1, DEC_A2 = 64, 128    # scaled-down decoder_arch (last entry = D)

    key = jax.random.PRNGKey(0)
    kx, keps, kp = jax.random.split(key, 3)

    # one-hot token sequences, as the categorical likelihood expects
    tok = jax.random.randint(kx, (B, S), 0, V)
    x = jax.nn.one_hot(tok, V, dtype=jnp.float32)

    # TODO(synk): torch.distributions Normal(0,1).sample() is inherently random;
    # a deterministic eps is drawn here and fed into the kernel instead.
    eps = jax.random.normal(keps, (B, L), jnp.float32)

    params = init_params(kp, D, ENC_H1, ENC_H2, L, DEC_A1, DEC_A2)

    out = deep_sequence_simple_forward(x, eps, params, tk=128, st=8)
    out = jax.tree_util.tree_map(jax.block_until_ready, out)

    assert out["x_hat"].shape == (B, S, V)
    assert out["logpx_z"].shape == (B,)
    assert out["z_mu"].shape == (B, L)
    assert out["z_logsigma"].shape == (B, L)

    ref = reference_forward(x, eps, params)
    for name in ("x_hat", "logpx_z", "z_mu", "z_logsigma"):
        assert jnp.allclose(out[name], ref[name], rtol=3e-2, atol=3e-2), name

    print("KERNEL_OK")
</pallas_src>

<mosaic_0001>
module attributes {stable_mosaic.version = 11 : i64} {
  func.func @_enc_dec_kernel(%arg0: i32, %arg1: memref<8x128xf32, #tpu.memory_space<vmem>>, %arg2: memref<128x128xbf16, #tpu.memory_space<vmem>>, %arg3: memref<1x128xf32, #tpu.memory_space<vmem>>, %arg4: memref<128x128xbf16, #tpu.memory_space<vmem>>, %arg5: memref<1x128xf32, #tpu.memory_space<vmem>>, %arg6: memref<128x256xbf16, #tpu.memory_space<vmem>>, %arg7: memref<1x256xf32, #tpu.memory_space<vmem>>, %arg8: memref<8x128xf32, #tpu.memory_space<vmem>>, %arg9: memref<128x64xbf16, #tpu.memory_space<vmem>>, %arg10: memref<1x64xf32, #tpu.memory_space<vmem>>, %arg11: memref<64x128xbf16, #tpu.memory_space<vmem>>, %arg12: memref<1x128xf32, #tpu.memory_space<vmem>>, %arg13: memref<8x256xf32, #tpu.memory_space<vmem>>, %arg14: memref<8x128xf32, #tpu.memory_space<vmem>>, %arg15: memref<8x128xf32, #tpu.memory_space<vmem>>) attributes {dimension_semantics = [#tpu.dimension_semantics<arbitrary>], iteration_bounds = array<i64: 2>, scalar_prefetch = 0 : i64, scratch_operands = 1 : i64, tpu.core_type = #tpu.core_type<tc>, window_params = [{transform_indices = @transform_0, window_bounds = array<i64: 8, 128>}, {transform_indices = @transform_1, window_bounds = array<i64: 128, 128>}, {pipeline_mode = #tpu.pipeline_mode<synchronous>, transform_indices = @transform_2, window_bounds = array<i64: 1, 128>}, {pipeline_mode = #tpu.pipeline_mode<synchronous>, transform_indices = @transform_3, window_bounds = array<i64: 128, 128>}, {pipeline_mode = #tpu.pipeline_mode<synchronous>, transform_indices = @transform_4, window_bounds = array<i64: 1, 128>}, {pipeline_mode = #tpu.pipeline_mode<synchronous>, transform_indices = @transform_5, window_bounds = array<i64: 128, 256>}, {pipeline_mode = #tpu.pipeline_mode<synchronous>, transform_indices = @transform_6, window_bounds = array<i64: 1, 256>}, {pipeline_mode = #tpu.pipeline_mode<synchronous>, transform_indices = @transform_7, window_bounds = array<i64: 8, 128>}, {pipeline_mode = #tpu.pipeline_mode<synchronous>, transform_indices = @transform_8, window_bounds = array<i64: 128, 64>}, {pipeline_mode = #tpu.pipeline_mode<synchronous>, transform_indices = @transform_9, window_bounds = array<i64: 1, 64>}, {pipeline_mode = #tpu.pipeline_mode<synchronous>, transform_indices = @transform_10, window_bounds = array<i64: 64, 128>}, {pipeline_mode = #tpu.pipeline_mode<synchronous>, transform_indices = @transform_11, window_bounds = array<i64: 1, 128>}, {pipeline_mode = #tpu.pipeline_mode<synchronous>, transform_indices = @transform_12, window_bounds = array<i64: 8, 256>}, {pipeline_mode = #tpu.pipeline_mode<synchronous>, transform_indices = @transform_13, window_bounds = array<i64: 8, 128>}]} {
    %c0_i32 = arith.constant 0 : i32
    %0 = arith.cmpi eq, %arg0, %c0_i32 : i32
    %1 = arith.extui %0 : i1 to i32
    %c0_i32_0 = arith.constant 0 : i32
    %2 = arith.cmpi ne, %1, %c0_i32_0 : i32
    scf.if %2 {
      %cst_9 = arith.constant 0.000000e+00 : f32
      %13 = vector.broadcast %cst_9 : f32 to vector<8x128xf32>
      %c0_10 = arith.constant 0 : index
      %c0_11 = arith.constant 0 : index
      %14 = vector.load %arg15[%c0_10, %c0_11] : memref<8x128xf32, #tpu.memory_space<vmem>>, vector<8x128xf32>
      tpu.vector_store %arg15[%c0_10, %c0_11], %13 {strides = array<i32>} : memref<8x128xf32, #tpu.memory_space<vmem>>, vector<8x128xf32>,
    } else {
    }
    %c0 = arith.constant 0 : index
    %c0_1 = arith.constant 0 : index
    %3 = vector.load %arg15[%c0, %c0_1] : memref<8x128xf32, #tpu.memory_space<vmem>>, vector<8x128xf32>
    %c0_2 = arith.constant 0 : index
    %c0_3 = arith.constant 0 : index
    %4 = vector.load %arg1[%c0_2, %c0_3] : memref<8x128xf32, #tpu.memory_space<vmem>>, vector<8x128xf32>
    %5 = arith.truncf %4 : vector<8x128xf32> to vector<8x128xbf16>
    %c0_4 = arith.constant 0 : index
    %c0_5 = arith.constant 0 : index
    %6 = vector.load %arg2[%c0_4, %c0_5] : memref<128x128xbf16, #tpu.memory_space<vmem>>, vector<128x128xbf16>
    %cst = arith.constant dense<0.000000e+00> : vector<8x128xf32>
    %7 = tpu.matmul %5, %6, %cst {dimension_numbers = #tpu.dot_dimension_numbers<[1], [0], [0], [1], [0, 0, 1, 1], [], []>} : vector<8x128xbf16>, vector<128x128xbf16>, vector<8x128xf32> -> vector<8x128xf32>
    %8 = arith.addf %3, %7 : vector<8x128xf32>
    %c0_6 = arith.constant 0 : index
    %c0_7 = arith.constant 0 : index
    %9 = vector.load %arg15[%c0_6, %c0_7] : memref<8x128xf32, #tpu.memory_space<vmem>>, vector<8x128xf32>
    tpu.vector_store %arg15[%c0_6, %c0_7], %8 {strides = array<i32>} : memref<8x128xf32, #tpu.memory_space<vmem>>, vector<8x128xf32>,
    %c1_i32 = arith.constant 1 : i32
    %10 = arith.cmpi eq, %arg0, %c1_i32 : i32
    %11 = arith.extui %10 : i1 to i32
    %c0_i32_8 = arith.constant 0 : i32
    %12 = arith.cmpi ne, %11, %c0_i32_8 : i32
    scf.if %12 {
      %c0_9 = arith.constant 0 : index
      %c0_10 = arith.constant 0 : index
      %13 = vector.load %arg15[%c0_9, %c0_10] : memref<8x128xf32, #tpu.memory_space<vmem>>, vector<8x128xf32>
      %c0_11 = arith.constant 0 : index
      %c0_12 = arith.constant 0 : index
      %14 = vector.load %arg3[%c0_11, %c0_12] : memref<1x128xf32, #tpu.memory_space<vmem>>, vector<1x128xf32>
      %15 = vector.broadcast %14 : vector<1x128xf32> to vector<8x128xf32>
      %16 = arith.addf %13, %15 : vector<8x128xf32>
      %cst_13 = arith.constant 0.000000e+00 : f32
      %17 = vector.broadcast %cst_13 : f32 to vector<8x128xf32>
      %18 = arith.maximumf %16, %17 : vector<8x128xf32>
      %19 = arith.truncf %18 : vector<8x128xf32> to vector<8x128xbf16>
      %c0_14 = arith.constant 0 : index
      %c0_15 = arith.constant 0 : index
      %20 = vector.load %arg4[%c0_14, %c0_15] : memref<128x128xbf16, #tpu.memory_space<vmem>>, vector<128x128xbf16>
      %cst_16 = arith.constant dense<0.000000e+00> : vector<8x128xf32>
      %21 = tpu.matmul %19, %20, %cst_16 {dimension_numbers = #tpu.dot_dimension_numbers<[1], [0], [0], [1], [0, 0, 1, 1], [], []>} : vector<8x128xbf16>, vector<128x128xbf16>, vector<8x128xf32> -> vector<8x128xf32>
      %c0_17 = arith.constant 0 : index
      %c0_18 = arith.constant 0 : index
      %22 = vector.load %arg5[%c0_17, %c0_18] : memref<1x128xf32, #tpu.memory_space<vmem>>, vector<1x128xf32>
      %23 = vector.broadcast %22 : vector<1x128xf32> to vector<8x128xf32>
      %24 = arith.addf %21, %23 : vector<8x128xf32>
      %cst_19 = arith.constant 0.000000e+00 : f32
      %25 = vector.broadcast %cst_19 : f32 to vector<8x128xf32>
      %26 = arith.maximumf %24, %25 : vector<8x128xf32>
      %27 = arith.truncf %26 : vector<8x128xf32> to vector<8x128xbf16>
      %c0_20 = arith.constant 0 : index
      %c0_21 = arith.constant 0 : index
      %28 = vector.load %arg6[%c0_20, %c0_21] : memref<128x256xbf16, #tpu.memory_space<vmem>>, vector<128x256xbf16>
      %cst_22 = arith.constant dense<0.000000e+00> : vector<8x256xf32>
      %29 = tpu.matmul %27, %28, %cst_22 {dimension_numbers = #tpu.dot_dimension_numbers<[1], [0], [0], [1], [0, 0, 1, 1], [], []>} : vector<8x128xbf16>, vector<128x256xbf16>, vector<8x256xf32> -> vector<8x256xf32>
      %c0_23 = arith.constant 0 : index
      %c0_24 = arith.constant 0 : index
      %30 = vector.load %arg7[%c0_23, %c0_24] : memref<1x256xf32, #tpu.memory_space<vmem>>, vector<1x256xf32>
      %31 = vector.broadcast %30 : vector<1x256xf32> to vector<8x256xf32>
      %32 = arith.addf %29, %31 : vector<8x256xf32>
      %c0_25 = arith.constant 0 : index
      %c0_26 = arith.constant 0 : index
      %33 = vector.load %arg13[%c0_25, %c0_26] : memref<8x256xf32, #tpu.memory_space<vmem>>, vector<8x256xf32>
      tpu.vector_store %arg13[%c0_25, %c0_26], %32 {strides = array<i32>} : memref<8x256xf32, #tpu.memory_space<vmem>>, vector<8x256xf32>,
      %34 = vector.extract_strided_slice %32 {offsets = [0, 0], sizes = [8, 128], strides = [1, 1]} : vector<8x256xf32> to vector<8x128xf32>
      %35 = vector.extract_strided_slice %32 {offsets = [0, 128], sizes = [8, 128], strides = [1, 1]} : vector<8x256xf32> to vector<8x128xf32>
      %36 = math.exp %35 : vector<8x128xf32>
      %c0_27 = arith.constant 0 : index
      %c0_28 = arith.constant 0 : index
      %37 = vector.load %arg8[%c0_27, %c0_28] : memref<8x128xf32, #tpu.memory_space<vmem>>, vector<8x128xf32>
      %38 = arith.mulf %36, %37 : vector<8x128xf32>
      %39 = arith.addf %34, %38 : vector<8x128xf32>
      %40 = arith.truncf %39 : vector<8x128xf32> to vector<8x128xbf16>
      %c0_29 = arith.constant 0 : index
      %c0_30 = arith.constant 0 : index
      %41 = vector.load %arg9[%c0_29, %c0_30] : memref<128x64xbf16, #tpu.memory_space<vmem>>, vector<128x64xbf16>
      %cst_31 = arith.constant dense<0.000000e+00> : vector<8x64xf32>
      %42 = tpu.matmul %40, %41, %cst_31 {dimension_numbers = #tpu.dot_dimension_numbers<[1], [0], [0], [1], [0, 0, 1, 1], [], []>} : vector<8x128xbf16>, vector<128x64xbf16>, vector<8x64xf32> -> vector<8x64xf32>
      %c0_32 = arith.constant 0 : index
      %c0_33 = arith.constant 0 : index
      %43 = vector.load %arg10[%c0_32, %c0_33] : memref<1x64xf32, #tpu.memory_space<vmem>>, vector<1x64xf32>
      %44 = vector.broadcast %43 : vector<1x64xf32> to vector<8x64xf32>
      %45 = arith.addf %42, %44 : vector<8x64xf32>
      %cst_34 = arith.constant 0.000000e+00 : f32
      %46 = vector.broadcast %cst_34 : f32 to vector<8x64xf32>
      %47 = arith.maximumf %45, %46 : vector<8x64xf32>
      %48 = arith.truncf %47 : vector<8x64xf32> to vector<8x64xbf16>
      %c0_35 = arith.constant 0 : index
      %c0_36 = arith.constant 0 : index
      %49 = vector.load %arg11[%c0_35, %c0_36] : memref<64x128xbf16, #tpu.memory_space<vmem>>, vector<64x128xbf16>
      %cst_37 = arith.constant dense<0.000000e+00> : vector<8x128xf32>
      %50 = tpu.matmul %48, %49, %cst_37 {dimension_numbers = #tpu.dot_dimension_numbers<[1], [0], [0], [1], [0, 0, 1, 1], [], []>} : vector<8x64xbf16>, vector<64x128xbf16>, vector<8x128xf32> -> vector<8x128xf32>
      %c0_38 = arith.constant 0 : index
      %c0_39 = arith.constant 0 : index
      %51 = vector.load %arg12[%c0_38, %c0_39] : memref<1x128xf32, #tpu.memory_space<vmem>>, vector<1x128xf32>
      %52 = vector.broadcast %51 : vector<1x128xf32> to vector<8x128xf32>
      %53 = arith.addf %50, %52 : vector<8x128xf32>
      %cst_40 = arith.constant 0.000000e+00 : f32
      %54 = vector.broadcast %cst_40 : f32 to vector<8x128xf32>
      %55 = arith.maximumf %53, %54 : vector<8x128xf32>
      %c0_41 = arith.constant 0 : index
      %c0_42 = arith.constant 0 : index
      %56 = vector.load %arg14[%c0_41, %c0_42] : memref<8x128xf32, #tpu.memory_space<vmem>>, vector<8x128xf32>
      tpu.vector_store %arg14[%c0_41, %c0_42], %55 {strides = array<i32>} : memref<8x128xf32, #tpu.memory_space<vmem>>, vector<8x128xf32>,
    } else {
    }
    return
  }
  func.func @transform_0(%arg0: i32) -> (i32, i32) {
    %c0_i32 = arith.constant 0 : i32
    %c0_i32_0 = arith.constant 0 : i32
    return %c0_i32, %arg0 : i32, i32
  }
  func.func @transform_1(%arg0: i32) -> (i32, i32) {
    %c0_i32 = arith.constant 0 : i32
    %c0_i32_0 = arith.constant 0 : i32
    return %arg0, %c0_i32 : i32, i32
  }
  func.func @transform_2(%arg0: i32) -> (i32, i32) {
    %c0_i32 = arith.constant 0 : i32
    %c0_i32_0 = arith.constant 0 : i32
    %c0_i32_1 = arith.constant 0 : i32
    return %c0_i32, %c0_i32_0 : i32, i32
  }
  func.func @transform_3(%arg0: i32) -> (i32, i32) {
    %c0_i32 = arith.constant 0 : i32
    %c0_i32_0 = arith.constant 0 : i32
    %c0_i32_1 = arith.constant 0 : i32
    return %c0_i32, %c0_i32_0 : i32, i32
  }
  func.func @transform_4(%arg0: i32) -> (i32, i32) {
    %c0_i32 = arith.constant 0 : i32
    %c0_i32_0 = arith.constant 0 : i32
    %c0_i32_1 = arith.constant 0 : i32
    return %c0_i32, %c0_i32_0 : i32, i32
  }
  func.func @transform_5(%arg0: i32) -> (i32, i32) {
    %c0_i32 = arith.constant 0 : i32
    %c0_i32_0 = arith.constant 0 : i32
    %c0_i32_1 = arith.constant 0 : i32
    return %c0_i32, %c0_i32_0 : i32, i32
  }
  func.func @transform_6(%arg0: i32) -> (i32, i32) {
    %c0_i32 = arith.constant 0 : i32
    %c0_i32_0 = arith.constant 0 : i32
    %c0_i32_1 = arith.constant 0 : i32
    return %c0_i32, %c0_i32_0 : i32, i32
  }
  func.func @transform_7(%arg0: i32) -> (i32, i32) {
    %c0_i32 = arith.constant 0 : i32
    %c0_i32_0 = arith.constant 0 : i32
    %c0_i32_1 = arith.constant 0 : i32
    return %c0_i32, %c0_i32_0 : i32, i32
  }
  func.func @transform_8(%arg0: i32) -> (i32, i32) {
    %c0_i32 = arith.constant 0 : i32
    %c0_i32_0 = arith.constant 0 : i32
    %c0_i32_1 = arith.constant 0 : i32
    return %c0_i32, %c0_i32_0 : i32, i32
  }
  func.func @transform_9(%arg0: i32) -> (i32, i32) {
    %c0_i32 = arith.constant 0 : i32
    %c0_i32_0 = arith.constant 0 : i32
    %c0_i32_1 = arith.constant 0 : i32
    return %c0_i32, %c0_i32_0 : i32, i32
  }
  func.func @transform_10(%arg0: i32) -> (i32, i32) {
    %c0_i32 = arith.constant 0 : i32
    %c0_i32_0 = arith.constant 0 : i32
    %c0_i32_1 = arith.constant 0 : i32
    return %c0_i32, %c0_i32_0 : i32, i32
  }
  func.func @transform_11(%arg0: i32) -> (i32, i32) {
    %c0_i32 = arith.constant 0 : i32
    %c0_i32_0 = arith.constant 0 : i32
    %c0_i32_1 = arith.constant 0 : i32
    return %c0_i32, %c0_i32_0 : i32, i32
  }
  func.func @transform_12(%arg0: i32) -> (i32, i32) {
    %c0_i32 = arith.constant 0 : i32
    %c0_i32_0 = arith.constant 0 : i32
    %c0_i32_1 = arith.constant 0 : i32
    return %c0_i32, %c0_i32_0 : i32, i32
  }
  func.func @transform_13(%arg0: i32) -> (i32, i32) {
    %c0_i32 = arith.constant 0 : i32
    %c0_i32_0 = arith.constant 0 : i32
    %c0_i32_1 = arith.constant 0 : i32
    return %c0_i32, %c0_i32_0 : i32, i32
  }
}

</mosaic_0001>

<llo_original>
// kernel: tpu_custom_call.1
$region0: #{tpu_custom_call.1}
  #allocation0 [shape = 'u32[]', space=smem, size = 0x4, offset = 0x4, fixed_abs, tag = 'smem constant byte address 0x4 - core index']
  #allocation1 [shape = 'u32[144,128]{1,0:T(1,128)}', space=vmem, size = 0x12000, scoped, tag = 'internal scratch']
  #allocation2 [shape = 'f32[8,128]{1,0:T(8,128)}', space=vmem, size = 0x1000, scoped, tag = 'scratch operand']
  %s0 = inlined_call_operand.hbm [shape: f32[8,256], index: 0, kind: input, shape index: {}]
  %s1 = inlined_call_operand.hbm [shape: bf16[256,128], index: 1, kind: input, shape index: {}]
  %s2 = inlined_call_operand.vmem [shape: f32[1,128], index: 2, kind: input, shape index: {}]
  %s3 = inlined_call_operand.vmem [shape: bf16[128,128], index: 3, kind: input, shape index: {}]
  %s4 = inlined_call_operand.vmem [shape: f32[1,128], index: 4, kind: input, shape index: {}]
  %s5 = inlined_call_operand.hbm [shape: bf16[128,256], index: 5, kind: input, shape index: {}]
  %s6 = inlined_call_operand.vmem [shape: f32[1,256], index: 6, kind: input, shape index: {}]
  %s7 = inlined_call_operand.vmem [shape: f32[8,128], index: 7, kind: input, shape index: {}]
  %s8 = inlined_call_operand.vmem [shape: bf16[128,64], index: 8, kind: input, shape index: {}]
  %s9 = inlined_call_operand.vmem [shape: f32[1,64], index: 9, kind: input, shape index: {}]
  %s10 = inlined_call_operand.vmem [shape: bf16[64,128], index: 10, kind: input, shape index: {}]
  %s11 = inlined_call_operand.vmem [shape: f32[1,128], index: 11, kind: input, shape index: {}]
  %s12 = inlined_call_operand.hbm [shape: f32[8,256], index: 12, kind: output, shape index: {0}]
  %s13 = inlined_call_operand.hbm [shape: f32[8,128], index: 13, kind: output, shape index: {1}]
  %14 = xla_tuple %s12, %s13
  %s15 = sld [smem:[#allocation0]]
  $region109: #{tpu_custom_call.1} parent=0
    _
  %s17 = ssub.s32 1, %s15
  %s18 = scalar_select 0, %s17, %s15
  $region1: #{tpu_custom_call.1} parent=0
    #allocation3 [shape = 'u8[8192]{0}', space=vmem, size = 0x2000, scoped, tag = 'input window, operand 0']
    #allocation4 [shape = 's32[2]{0}', space=sflag, size = 0x8, scoped, tag = 'scoped memory for tpu_custom_call.1']
    #allocation5 [shape = 's32[2]{0}', space=sflag, size = 0x8, scoped, tag = 'scoped memory for tpu_custom_call.1']
    #allocation6 [shape = 'u8[65536]{0}', space=vmem, size = 0x10000, scoped, tag = 'input window, operand 1']
    #allocation7 [shape = 's32[2]{0}', space=sflag, size = 0x8, scoped, tag = 'scoped memory for tpu_custom_call.1']
    #allocation8 [shape = 'u8[65536]{0}', space=vmem, size = 0x10000, scoped, tag = 'input window, operand 5, single buffered']
    #allocation9 [shape = 'u8[8192]{0}', space=vmem, size = 0x2000, scoped, tag = 'output window, operand 0, single buffered']
    #allocation10 [shape = 'u8[4096]{0}', space=vmem, size = 0x1000, scoped, tag = 'output window, operand 1, single buffered']
    #allocation11 [shape = 's32[1]{0}', space=sflag, size = 0x4, scoped, tag = 'scoped memory for tpu_custom_call.1']
    %19 = vsyncpa [#allocation4], 0
    %s20 = scalar_lea.sflag [#allocation4], 1
    %21 = vsyncpa %s20, 0
    %22 = vsyncpa [#allocation7], 0
    %s23 = scalar_lea.sflag [#allocation7], 1
    %24 = vsyncpa %s23, 0
    %25 = vsyncpa [#allocation5], 0
    %26 = vsyncpa [#allocation11], 0
    loop: start=0, step=1, limit=4
    $region2: #{tpu_custom_call.1} parent=1 // loop_pre_header
      _
    $region3: #{tpu_custom_call.1} parent=1 // loop_header
      %s28 = sphi 0, %s32
      %p29 = scmp.ge.s32.totalorder %s28, 4
      %s38 = sphi 0, %s40
      %s41 = sphi 0, %s38
      %s42 = sphi 0, %s41
      %s58 = sphi 0, %s42
      %s64 = sphi 0, %s66
      %s67 = sphi 0, %s64
      %s68 = sphi 0, %s67
      %s84 = sphi 0, %s68
      %s88 = sphi 0, %s88
      %s90 = sphi 0, %s88
      %s91 = sphi 0, %s90
      %s105 = sphi 0, %s91
      %s109 = sphi 0, %s109
      %s111 = sphi 0, %s109
      %s112 = sphi 0, %s111
      %s126 = sphi 0, %s112
      %s130 = sphi 0, %s130
      %s132 = sphi 0, %s130
      %s133 = sphi 0, %s132
      %s147 = sphi 0, %s133
      %s151 = sphi 0, %s151
      %s153 = sphi 0, %s151
      %s154 = sphi 0, %s153
      %s168 = sphi 0, %s154
      %s172 = sphi 0, %s172
      %s174 = sphi 0, %s172
      %s175 = sphi 0, %s174
      %s189 = sphi 0, %s175
      %s193 = sphi 0, %s193
      %s195 = sphi 0, %s193
      %s196 = sphi 0, %s195
      %s210 = sphi 0, %s196
      %s214 = sphi 0, %s214
      %s216 = sphi 0, %s214
      %s217 = sphi 0, %s216
      %s231 = sphi 0, %s217
      %s235 = sphi 0, %s235
      %s237 = sphi 0, %s235
      %s238 = sphi 0, %s237
      %s252 = sphi 0, %s238
      %s256 = sphi 0, %s256
      %s258 = sphi 0, %s256
      %s259 = sphi 0, %s258
      %s273 = sphi 0, %s259
      %s277 = sphi 0, %s277
      %s279 = sphi 0, %s277
      %s280 = sphi 0, %s279
      %s294 = sphi 0, %s280
      %s298 = sphi 0, %s298
      %s300 = sphi 0, %s298
      %s301 = sphi 0, %s300
      %s315 = sphi 0, %s301
      %s319 = sphi 0, %s319
      %s321 = sphi 0, %s319
      %s322 = sphi 0, %s321
      %s336 = sphi 0, %s322
    $region4: #{tpu_custom_call.1} parent=1 // loop_header_branch
      %31 = sbr.rel (%p29) target = $region8
    $region5: #{tpu_custom_call.1} parent=1 // loop_body
      %s33 = ssub.s32 %s28, 1
      %s34 = ssub.s32 %s28, 2
      %s35 = sadd.s32 %s28, 1
      %s36 = ssub.s32 %s28, %s35
      %p37 = scmp.eq.s32.totalorder %s36, 0
      %s39 = sadd.s32 %s38, 1
      %s40 = scalar_select %p37, %s38, %s39
      %p43 = pneg %p37
      %p44 = scmp.eq.s32.totalorder %s28, 1
      %p45 = por %p43, %p44
      %p46 = scmp.ne.s32.totalorder %s38, %s41
      %p47 = scmp.eq.s32.totalorder %s28, 0
      %p48 = por %p46, %p47
      %p49 = scmp.ne.s32.totalorder %s38, %s41
      %p50 = scmp.eq.s32.totalorder %s33, 1
      %p51 = por %p49, %p50
      %p52 = scmp.ne.s32.totalorder %s41, %s42
      %p53 = scmp.eq.s32.totalorder %s33, 0
      %p54 = por %p52, %p53
      %p55 = scmp.ne.s32.totalorder %s41, %s42
      %p56 = scmp.eq.s32.totalorder %s34, 1
      %p57 = por %p55, %p56
      %p59 = scmp.ne.s32.totalorder %s42, %s58
      %p60 = scmp.eq.s32.totalorder %s34, 0
      %p61 = por %p59, %p60
      %s62 = ssub.s32 %s28, %s35
      %p63 = scmp.eq.s32.totalorder %s62, 0
      %s65 = sadd.s32 %s64, 1
      %s66 = scalar_select %p63, %s64, %s65
      %p69 = pneg %p63
      %p70 = scmp.eq.s32.totalorder %s28, 1
      %p71 = por %p69, %p70
      %p72 = scmp.ne.s32.totalorder %s64, %s67
      %p73 = scmp.eq.s32.totalorder %s28, 0
      %p74 = por %p72, %p73
      %p75 = scmp.ne.s32.totalorder %s64, %s67
      %p76 = scmp.eq.s32.totalorder %s33, 1
      %p77 = por %p75, %p76
      %p78 = scmp.ne.s32.totalorder %s67, %s68
      %p79 = scmp.eq.s32.totalorder %s33, 0
      %p80 = por %p78, %p79
      %p81 = scmp.ne.s32.totalorder %s67, %s68
      %p82 = scmp.eq.s32.totalorder %s34, 1
      %p83 = por %p81, %p82
      %p85 = scmp.ne.s32.totalorder %s68, %s84
      %p86 = scmp.eq.s32.totalorder %s34, 0
      %p87 = por %p85, %p86
      %s89 = sadd.s32 %s88, 1
      %p92 = scmp.eq.s32.totalorder %s28, 1
      %p93 = scmp.ne.s32.totalorder %s88, %s90
      %p94 = scmp.eq.s32.totalorder %s28, 0
      %p95 = por %p93, %p94
      %p96 = scmp.ne.s32.totalorder %s88, %s90
      %p97 = scmp.eq.s32.totalorder %s33, 1
      %p98 = por %p96, %p97
      %p99 = scmp.ne.s32.totalorder %s90, %s91
      %p100 = scmp.eq.s32.totalorder %s33, 0
      %p101 = por %p99, %p100
      %p102 = scmp.ne.s32.totalorder %s90, %s91
      %p103 = scmp.eq.s32.totalorder %s34, 1
      %p104 = por %p102, %p103
      %p106 = scmp.ne.s32.totalorder %s91, %s105
      %p107 = scmp.eq.s32.totalorder %s34, 0
      %p108 = por %p106, %p107
      %s110 = sadd.s32 %s109, 1
      %p113 = scmp.eq.s32.totalorder %s28, 1
      %p114 = scmp.ne.s32.totalorder %s109, %s111
      %p115 = scmp.eq.s32.totalorder %s28, 0
      %p116 = por %p114, %p115
      %p117 = scmp.ne.s32.totalorder %s109, %s111
      %p118 = scmp.eq.s32.totalorder %s33, 1
      %p119 = por %p117, %p118
      %p120 = scmp.ne.s32.totalorder %s111, %s112
      %p121 = scmp.eq.s32.totalorder %s33, 0
      %p122 = por %p120, %p121
      %p123 = scmp.ne.s32.totalorder %s111, %s112
      %p124 = scmp.eq.s32.totalorder %s34, 1
      %p125 = por %p123, %p124
      %p127 = scmp.ne.s32.totalorder %s112, %s126
      %p128 = scmp.eq.s32.totalorder %s34, 0
      %p129 = por %p127, %p128
      %s131 = sadd.s32 %s130, 1
      %p134 = scmp.eq.s32.totalorder %s28, 1
      %p135 = scmp.ne.s32.totalorder %s130, %s132
      %p136 = scmp.eq.s32.totalorder %s28, 0
      %p137 = por %p135, %p136
      %p138 = scmp.ne.s32.totalorder %s130, %s132
      %p139 = scmp.eq.s32.totalorder %s33, 1
      %p140 = por %p138, %p139
      %p141 = scmp.ne.s32.totalorder %s132, %s133
      %p142 = scmp.eq.s32.totalorder %s33, 0
      %p143 = por %p141, %p142
      %p144 = scmp.ne.s32.totalorder %s132, %s133
      %p145 = scmp.eq.s32.totalorder %s34, 1
      %p146 = por %p144, %p145
      %p148 = scmp.ne.s32.totalorder %s133, %s147
      %p149 = scmp.eq.s32.totalorder %s34, 0
      %p150 = por %p148, %p149
      %s152 = sadd.s32 %s151, 1
      %p155 = scmp.eq.s32.totalorder %s28, 1
      %p156 = scmp.ne.s32.totalorder %s151, %s153
      %p157 = scmp.eq.s32.totalorder %s28, 0
      %p158 = por %p156, %p157
      %p159 = scmp.ne.s32.totalorder %s151, %s153
      %p160 = scmp.eq.s32.totalorder %s33, 1
      %p161 = por %p159, %p160
      %p162 = scmp.ne.s32.totalorder %s153, %s154
      %p163 = scmp.eq.s32.totalorder %s33, 0
      %p164 = por %p162, %p163
      %p165 = scmp.ne.s32.totalorder %s153, %s154
      %p166 = scmp.eq.s32.totalorder %s34, 1
      %p167 = por %p165, %p166
      %p169 = scmp.ne.s32.totalorder %s154, %s168
      %p170 = scmp.eq.s32.totalorder %s34, 0
      %p171 = por %p169, %p170
      %s173 = sadd.s32 %s172, 1
      %p176 = scmp.eq.s32.totalorder %s28, 1
      %p177 = scmp.ne.s32.totalorder %s172, %s174
      %p178 = scmp.eq.s32.totalorder %s28, 0
      %p179 = por %p177, %p178
      %p180 = scmp.ne.s32.totalorder %s172, %s174
      %p181 = scmp.eq.s32.totalorder %s33, 1
      %p182 = por %p180, %p181
      %p183 = scmp.ne.s32.totalorder %s174, %s175
      %p184 = scmp.eq.s32.totalorder %s33, 0
      %p185 = por %p183, %p184
      %p186 = scmp.ne.s32.totalorder %s174, %s175
      %p187 = scmp.eq.s32.totalorder %s34, 1
      %p188 = por %p186, %p187
      %p190 = scmp.ne.s32.totalorder %s175, %s189
      %p191 = scmp.eq.s32.totalorder %s34, 0
      %p192 = por %p190, %p191
      %s194 = sadd.s32 %s193, 1
      %p197 = scmp.eq.s32.totalorder %s28, 1
      %p198 = scmp.ne.s32.totalorder %s193, %s195
      %p199 = scmp.eq.s32.totalorder %s28, 0
      %p200 = por %p198, %p199
      %p201 = scmp.ne.s32.totalorder %s193, %s195
      %p202 = scmp.eq.s32.totalorder %s33, 1
      %p203 = por %p201, %p202
      %p204 = scmp.ne.s32.totalorder %s195, %s196
      %p205 = scmp.eq.s32.totalorder %s33, 0
      %p206 = por %p204, %p205
      %p207 = scmp.ne.s32.totalorder %s195, %s196
      %p208 = scmp.eq.s32.totalorder %s34, 1
      %p209 = por %p207, %p208
      %p211 = scmp.ne.s32.totalorder %s196, %s210
      %p212 = scmp.eq.s32.totalorder %s34, 0
      %p213 = por %p211, %p212
      %s215 = sadd.s32 %s214, 1
      %p218 = scmp.eq.s32.totalorder %s28, 1
      %p219 = scmp.ne.s32.totalorder %s214, %s216
      %p220 = scmp.eq.s32.totalorder %s28, 0
      %p221 = por %p219, %p220
      %p222 = scmp.ne.s32.totalorder %s214, %s216
      %p223 = scmp.eq.s32.totalorder %s33, 1
      %p224 = por %p222, %p223
      %p225 = scmp.ne.s32.totalorder %s216, %s217
      %p226 = scmp.eq.s32.totalorder %s33, 0
      %p227 = por %p225, %p226
      %p228 = scmp.ne.s32.totalorder %s216, %s217
      %p229 = scmp.eq.s32.totalorder %s34, 1
      %p230 = por %p228, %p229
      %p232 = scmp.ne.s32.totalorder %s217, %s231
      %p233 = scmp.eq.s32.totalorder %s34, 0
      %p234 = por %p232, %p233
      %s236 = sadd.s32 %s235, 1
      %p239 = scmp.eq.s32.totalorder %s28, 1
      %p240 = scmp.ne.s32.totalorder %s235, %s237
      %p241 = scmp.eq.s32.totalorder %s28, 0
      %p242 = por %p240, %p241
      %p243 = scmp.ne.s32.totalorder %s235, %s237
      %p244 = scmp.eq.s32.totalorder %s33, 1
      %p245 = por %p243, %p244
      %p246 = scmp.ne.s32.totalorder %s237, %s238
      %p247 = scmp.eq.s32.totalorder %s33, 0
      %p248 = por %p246, %p247
      %p249 = scmp.ne.s32.totalorder %s237, %s238
      %p250 = scmp.eq.s32.totalorder %s34, 1
      %p251 = por %p249, %p250
      %p253 = scmp.ne.s32.totalorder %s238, %s252
      %p254 = scmp.eq.s32.totalorder %s34, 0
      %p255 = por %p253, %p254
      %s257 = sadd.s32 %s256, 1
      %p260 = scmp.eq.s32.totalorder %s28, 1
      %p261 = scmp.ne.s32.totalorder %s256, %s258
      %p262 = scmp.eq.s32.totalorder %s28, 0
      %p263 = por %p261, %p262
      %p264 = scmp.ne.s32.totalorder %s256, %s258
      %p265 = scmp.eq.s32.totalorder %s33, 1
      %p266 = por %p264, %p265
      %p267 = scmp.ne.s32.totalorder %s258, %s259
      %p268 = scmp.eq.s32.totalorder %s33, 0
      %p269 = por %p267, %p268
      %p270 = scmp.ne.s32.totalorder %s258, %s259
      %p271 = scmp.eq.s32.totalorder %s34, 1
      %p272 = por %p270, %p271
      %p274 = scmp.ne.s32.totalorder %s259, %s273
      %p275 = scmp.eq.s32.totalorder %s34, 0
      %p276 = por %p274, %p275
      %s278 = sadd.s32 %s277, 1
      %p281 = scmp.eq.s32.totalorder %s28, 1
      %p282 = scmp.ne.s32.totalorder %s277, %s279
      %p283 = scmp.eq.s32.totalorder %s28, 0
      %p284 = por %p282, %p283
      %p285 = scmp.ne.s32.totalorder %s277, %s279
      %p286 = scmp.eq.s32.totalorder %s33, 1
      %p287 = por %p285, %p286
      %p288 = scmp.ne.s32.totalorder %s279, %s280
      %p289 = scmp.eq.s32.totalorder %s33, 0
      %p290 = por %p288, %p289
      %p291 = scmp.ne.s32.totalorder %s279, %s280
      %p292 = scmp.eq.s32.totalorder %s34, 1
      %p293 = por %p291, %p292
      %p295 = scmp.ne.s32.totalorder %s280, %s294
      %p296 = scmp.eq.s32.totalorder %s34, 0
      %p297 = por %p295, %p296
      %s299 = sadd.s32 %s298, 1
      %p302 = scmp.eq.s32.totalorder %s28, 1
      %p303 = scmp.ne.s32.totalorder %s298, %s300
      %p304 = scmp.eq.s32.totalorder %s28, 0
      %p305 = por %p303, %p304
      %p306 = scmp.ne.s32.totalorder %s298, %s300
      %p307 = scmp.eq.s32.totalorder %s33, 1
      %p308 = por %p306, %p307
      %p309 = scmp.ne.s32.totalorder %s300, %s301
      %p310 = scmp.eq.s32.totalorder %s33, 0
      %p311 = por %p309, %p310
      %p312 = scmp.ne.s32.totalorder %s300, %s301
      %p313 = scmp.eq.s32.totalorder %s34, 1
      %p314 = por %p312, %p313
      %p316 = scmp.ne.s32.totalorder %s301, %s315
      %p317 = scmp.eq.s32.totalorder %s34, 0
      %p318 = por %p316, %p317
      %s320 = sadd.s32 %s319, 1
      %p323 = scmp.eq.s32.totalorder %s28, 1
      %p324 = scmp.ne.s32.totalorder %s319, %s321
      %p325 = scmp.eq.s32.totalorder %s28, 0
      %p326 = por %p324, %p325
      %p327 = scmp.ne.s32.totalorder %s319, %s321
      %p328 = scmp.eq.s32.totalorder %s33, 1
      %p329 = por %p327, %p328
      %p330 = scmp.ne.s32.totalorder %s321, %s322
      %p331 = scmp.eq.s32.totalorder %s33, 0
      %p332 = por %p330, %p331
      %p333 = scmp.ne.s32.totalorder %s321, %s322
      %p334 = scmp.eq.s32.totalorder %s34, 1
      %p335 = por %p333, %p334
      %p337 = scmp.ne.s32.totalorder %s322, %s336
      %p338 = scmp.eq.s32.totalorder %s34, 0
      %p339 = por %p337, %p338
      %p340 = scmp.le.s32.totalorder 1, %s28
      %p341 = scmp.lt.s32.totalorder %s28, 3
      %p342 = pnand %p340, %p341
      %p343 = pneg %p342
      // Predicated region
      $region9: #{tpu_custom_call.1} parent=5 // pred_check
        _
      $region10: #{tpu_custom_call.1} parent=5 // pred_check_branch
        %345 = sbr.rel (%p342) target = $region12
      $region11: #{tpu_custom_call.1} parent=5 // pred_region
        %s346 = ssub.s32 %s28, 1
        // Predicated region
        $region13: #{tpu_custom_call.1} parent=11 // pred_check
          %p347 = pneg %p101
        $region14: #{tpu_custom_call.1} parent=11 // pred_check_branch
          %349 = sbr.rel (%p347) target = $region16
        $region15: #{tpu_custom_call.1} parent=11 // pred_region
          _
        $region16: #{tpu_custom_call.1} parent=11 // pred_fallthru
          _
        // Predicated region
        $region17: #{tpu_custom_call.1} parent=11 // pred_check
          %p350 = pneg %p122
        $region18: #{tpu_custom_call.1} parent=11 // pred_check_branch
          %352 = sbr.rel (%p350) target = $region20
        $region19: #{tpu_custom_call.1} parent=11 // pred_region
          _
        $region20: #{tpu_custom_call.1} parent=11 // pred_fallthru
          _
        // Predicated region
        $region21: #{tpu_custom_call.1} parent=11 // pred_check
          %p353 = pneg %p143
        $region22: #{tpu_custom_call.1} parent=11 // pred_check_branch
          %355 = sbr.rel (%p353) target = $region24
        $region23: #{tpu_custom_call.1} parent=11 // pred_region
          _
        $region24: #{tpu_custom_call.1} parent=11 // pred_fallthru
          _
        // Predicated region
        $region25: #{tpu_custom_call.1} parent=11 // pred_check
          %p356 = pneg %p164
        $region26: #{tpu_custom_call.1} parent=11 // pred_check_branch
          %358 = sbr.rel (%p356) target = $region28
        $region27: #{tpu_custom_call.1} parent=11 // pred_region
          %s360 = ssub.s32 2048, 2048
          %361 = vsyncadd [#allocation7], %s360
          %s362 = sshll.u32 [#allocation8], 4
          %s363 = int_to_ptr.vmem [resolvable:$true] %s362
          %368 = dma.hbm_to_vmem [thread:$0]  %s5, 2048, %s363, [#allocation7], 128, 128, 8
        $region28: #{tpu_custom_call.1} parent=11 // pred_fallthru
          _
        // Predicated region
        $region29: #{tpu_custom_call.1} parent=11 // pred_check
          %p369 = pneg %p185
        $region30: #{tpu_custom_call.1} parent=11 // pred_check_branch
          %371 = sbr.rel (%p369) target = $region32
        $region31: #{tpu_custom_call.1} parent=11 // pred_region
          _
        $region32: #{tpu_custom_call.1} parent=11 // pred_fallthru
          _
        // Predicated region
        $region33: #{tpu_custom_call.1} parent=11 // pred_check
          %p372 = pneg %p206
        $region34: #{tpu_custom_call.1} parent=11 // pred_check_branch
          %374 = sbr.rel (%p372) target = $region36
        $region35: #{tpu_custom_call.1} parent=11 // pred_region
          _
        $region36: #{tpu_custom_call.1} parent=11 // pred_fallthru
          _
        // Predicated region
        $region37: #{tpu_custom_call.1} parent=11 // pred_check
          %p375 = pneg %p227
        $region38: #{tpu_custom_call.1} parent=11 // pred_check_branch
          %377 = sbr.rel (%p375) target = $region40
        $region39: #{tpu_custom_call.1} parent=11 // pred_region
          _
        $region40: #{tpu_custom_call.1} parent=11 // pred_fallthru
          _
        // Predicated region
        $region41: #{tpu_custom_call.1} parent=11 // pred_check
          %p378 = pneg %p248
        $region42: #{tpu_custom_call.1} parent=11 // pred_check_branch
          %380 = sbr.rel (%p378) target = $region44
        $region43: #{tpu_custom_call.1} parent=11 // pred_region
          _
        $region44: #{tpu_custom_call.1} parent=11 // pred_fallthru
          _
        // Predicated region
        $region45: #{tpu_custom_call.1} parent=11 // pred_check
          %p381 = pneg %p269
        $region46: #{tpu_custom_call.1} parent=11 // pred_check_branch
          %383 = sbr.rel (%p381) target = $region48
        $region47: #{tpu_custom_call.1} parent=11 // pred_region
          _
        $region48: #{tpu_custom_call.1} parent=11 // pred_fallthru
          _
        // Predicated region
        $region49: #{tpu_custom_call.1} parent=11 // pred_check
          %p384 = pneg %p290
        $region50: #{tpu_custom_call.1} parent=11 // pred_check_branch
          %386 = sbr.rel (%p384) target = $region52
        $region51: #{tpu_custom_call.1} parent=11 // pred_region
          _
        $region52: #{tpu_custom_call.1} parent=11 // pred_fallthru
          _
      $region12: #{tpu_custom_call.1} parent=5 // pred_fallthru
        _
      %p387 = scmp.lt.s32.totalorder %s28, 2
      // Predicated region
      $region53: #{tpu_custom_call.1} parent=5 // pred_check
        %p388 = pneg %p387
      $region54: #{tpu_custom_call.1} parent=5 // pred_check_branch
        %390 = sbr.rel (%p388) target = $region56
      $region55: #{tpu_custom_call.1} parent=5 // pred_region
        // Predicated region
        $region57: #{tpu_custom_call.1} parent=55 // pred_check
          %p391 = pneg %p48
        $region58: #{tpu_custom_call.1} parent=55 // pred_check_branch
          %393 = sbr.rel (%p391) target = $region60
        $region59: #{tpu_custom_call.1} parent=55 // pred_region
          %s394 = sand.u32 %s38, 1
          %s395 = scalar_lea.sflag [#allocation4], %s394
          %s396 = sand.u32 %s38, 1
          %s397 = smul.addr %s396, 8
          %s398 = scalar_lea.vmem [#allocation3], %s397
          %s400 = ssub.s32 128, 128
          %401 = vsyncadd %s395, %s400
          %s402 = smul.addr %s28, 128
          %s403 = scalar_lea.hbm %s0, %s402
          %s405 = sshll.u32 %s398, 4
          %s406 = int_to_ptr.vmem [resolvable:$true] %s405
          %408 = dma.hbm_to_vmem [thread:$0]  %s403, 128, %s406, %s395
        $region60: #{tpu_custom_call.1} parent=55 // pred_fallthru
          _
        // Predicated region
        $region61: #{tpu_custom_call.1} parent=55 // pred_check
          %p409 = pneg %p74
        $region62: #{tpu_custom_call.1} parent=55 // pred_check_branch
          %411 = sbr.rel (%p409) target = $region64
        $region63: #{tpu_custom_call.1} parent=55 // pred_region
          %s412 = sand.u32 %s28, 1
          %s413 = scalar_lea.sflag [#allocation7], %s412
          %s414 = sand.u32 %s64, 1
          %s415 = smul.addr %s414, 64
          %s416 = scalar_lea.vmem [#allocation6], %s415
          %s417 = smul.u32 16, %s28
          %s419 = ssub.s32 1024, 1024
          %420 = vsyncadd %s413, %s419
          %s421 = smul.addr %s417, 64
          %s422 = scalar_lea.hbm %s1, %s421
          %s423 = sshll.u32 %s416, 4
          %s424 = int_to_ptr.vmem [resolvable:$true] %s423
          %429 = dma.hbm_to_vmem [thread:$0]  %s422, 1024, %s424, %s413, 64, 64, 4
        $region64: #{tpu_custom_call.1} parent=55 // pred_fallthru
          _
      $region56: #{tpu_custom_call.1} parent=5 // pred_fallthru
        _
      %p430 = scmp.le.s32.totalorder 1, %s28
      %p431 = scmp.lt.s32.totalorder %s28, 3
      %p432 = pnand %p430, %p431
      %p433 = pneg %p432
      // Predicated region
      $region65: #{tpu_custom_call.1} parent=5 // pred_check
        _
      $region66: #{tpu_custom_call.1} parent=5 // pred_check_branch
        %435 = sbr.rel (%p432) target = $region68
      $region67: #{tpu_custom_call.1} parent=5 // pred_region
        %s436 = ssub.s32 %s28, 1
        %s437 = sand.u32 %s41, 1
        %s438 = scalar_lea.sflag [#allocation4], %s437
        %s439 = sand.u32 %s41, 1
        %s440 = smul.addr %s439, 8
        %s441 = scalar_lea.vmem [#allocation3], %s440
        // Predicated region
        $region69: #{tpu_custom_call.1} parent=67 // pred_check
          %p442 = pneg %p54
        $region70: #{tpu_custom_call.1} parent=67 // pred_check_branch
          %444 = sbr.rel (%p442) target = $region72
        $region71: #{tpu_custom_call.1} parent=67 // pred_region
          %445 = dma.done %s438, 128
        $region72: #{tpu_custom_call.1} parent=67 // pred_fallthru
          _
        %s446 = sand.u32 %s33, 1
        %s447 = scalar_lea.sflag [#allocation7], %s446
        %s448 = sand.u32 %s67, 1
        %s449 = smul.addr %s448, 64
        %s450 = scalar_lea.vmem [#allocation6], %s449
        // Predicated region
        $region73: #{tpu_custom_call.1} parent=67 // pred_check
          %p451 = pneg %p80
        $region74: #{tpu_custom_call.1} parent=67 // pred_check_branch
          %453 = sbr.rel (%p451) target = $region76
        $region75: #{tpu_custom_call.1} parent=67 // pred_region
          %454 = dma.done %s447, 1024
        $region76: #{tpu_custom_call.1} parent=67 // pred_fallthru
          _
        // Predicated region
        $region77: #{tpu_custom_call.1} parent=67 // pred_check
          %p455 = pneg %p164
        $region78: #{tpu_custom_call.1} parent=67 // pred_check_branch
          %457 = sbr.rel (%p455) target = $region80
        $region79: #{tpu_custom_call.1} parent=67 // pred_region
          %458 = dma.done [#allocation7], 2048
        $region80: #{tpu_custom_call.1} parent=67 // pred_fallthru
          _
        %s459 = sand.u32 %s41, 1
        %s460 = scalar_lea.sflag [#allocation4], %s459
        %s461 = sand.u32 %s41, 1
        %s462 = smul.addr %s461, 8
        %s463 = scalar_lea.vmem [#allocation3], %s462
        %p464 = pneg %p54
        %p465 = pneg %p51
        %s466 = sand.u32 %s33, 1
        %s467 = scalar_lea.sflag [#allocation7], %s466
        %s468 = sand.u32 %s67, 1
        %s469 = smul.addr %s468, 64
        %s470 = scalar_lea.vmem [#allocation6], %s469
        %p471 = pneg %p80
        %p472 = pneg %p77
        %p473 = pneg %p101
        %p474 = pneg %p98
        %p475 = pneg %p122
        %p476 = pneg %p119
        %p477 = pneg %p143
        %p478 = pneg %p140
        %p479 = pneg %p164
        %p480 = pneg %p161
        %p481 = pneg %p185
        %p482 = pneg %p182
        %p483 = pneg %p206
        %p484 = pneg %p203
        %p485 = pneg %p227
        %p486 = pneg %p224
        %p487 = pneg %p248
        %p488 = pneg %p245
        %p489 = pneg %p269
        %p490 = pneg %p266
        %p491 = pneg %p290
        %p492 = pneg %p287
        %p493 = pneg %p311
        %p494 = pneg %p308
        %p495 = pneg %p332
        %p496 = pneg %p329
        %s497 = smul.u32 16, %s33
        %p499 = scmp.eq.s32.totalorder %s33, 0
        // Predicated region
        $region81: #{tpu_custom_call.1} parent=67 // pred_check
          %p500 = pneg %p499
        $region82: #{tpu_custom_call.1} parent=67 // pred_check_branch
          %502 = sbr.rel (%p500) target = $region84
        $region83: #{tpu_custom_call.1} parent=67 // pred_region
          %503 = vst [vmem:[#allocation2] sm:$0xff] 0.0
        $region84: #{tpu_custom_call.1} parent=67 // pred_fallthru
          _
        %v504 = vld [vmem:[#allocation2] sm:$0xff]
        %v505 = vld [vmem:[%s441] sm:$0xff]
        %v506 = vpack.c.bf16 %v505, %v505
        %v507 = vld [vmem:[%s450] sm:$0xf]
        %v508 = vld [vmem:[%s450 + $0x4] sm:$0xf]
        %v509 = vld [vmem:[%s450 + $0x8] sm:$0xf]
        %v510 = vld [vmem:[%s450 + $0xc] sm:$0xf]
        %v511 = vld [vmem:[%s450 + $0x10] sm:$0xf]
        %v512 = vld [vmem:[%s450 + $0x14] sm:$0xf]
        %v513 = vld [vmem:[%s450 + $0x18] sm:$0xf]
        %v514 = vld [vmem:[%s450 + $0x1c] sm:$0xf]
        %v515 = vld [vmem:[%s450 + $0x20] sm:$0xf]
        %v516 = vld [vmem:[%s450 + $0x24] sm:$0xf]
        %v517 = vld [vmem:[%s450 + $0x28] sm:$0xf]
        %v518 = vld [vmem:[%s450 + $0x2c] sm:$0xf]
        %v519 = vld [vmem:[%s450 + $0x30] sm:$0xf]
        %v520 = vld [vmem:[%s450 + $0x34] sm:$0xf]
        %v521 = vld [vmem:[%s450 + $0x38] sm:$0xf]
        %v522 = vld [vmem:[%s450 + $0x3c] sm:$0xf]
        %v539 = vunpack.c.l.b16 %v507
        %v540 = vunpack.c.l.b16 %v508
        %v541 = vunpack.c.l.b16 %v509
        %v542 = vunpack.c.l.b16 %v510
        %v543 = vunpack.c.l.b16 %v511
        %v544 = vunpack.c.l.b16 %v512
        %v545 = vunpack.c.l.b16 %v513
        %v546 = vunpack.c.l.b16 %v514
        %v547 = vunpack.c.l.b16 %v515
        %v548 = vunpack.c.l.b16 %v516
        %v549 = vunpack.c.l.b16 %v517
        %v550 = vunpack.c.l.b16 %v518
        %v551 = vunpack.c.l.b16 %v519
        %v552 = vunpack.c.l.b16 %v520
        %v553 = vunpack.c.l.b16 %v521
        %v554 = vunpack.c.l.b16 %v522
        %v555 = vpack.c.b16 %v540, %v539
        %v556 = vpack.c.b16 %v542, %v541
        %v557 = vpack.c.b16 %v544, %v543
        %v558 = vpack.c.b16 %v546, %v545
        %v559 = vpack.c.b16 %v548, %v547
        %v560 = vpack.c.b16 %v550, %v549
        %v561 = vpack.c.b16 %v552, %v551
        %v562 = vpack.c.b16 %v554, %v553
        %571 = vmatprep.subr.bf16.mxu0 0
        %572 = vmatpush1.bf16.msra.mxu0 %v555
        %573 = vmatprep.subr.bf16.mxu0 0
        %574 = vmatpush1.bf16.msra.mxu0 %v556
        %575 = vmatprep.subr.bf16.mxu0 0
        %576 = vmatpush1.bf16.msra.mxu0 %v557
        %577 = vmatprep.subr.bf16.mxu0 0
        %578 = vmatpush1.bf16.msra.mxu0 %v558
        %579 = vmatprep.subr.bf16.mxu0 0
        %580 = vmatpush1.bf16.msra.mxu0 %v559
        %581 = vmatprep.subr.bf16.mxu0 0
        %582 = vmatpush1.bf16.msra.mxu0 %v560
        %583 = vmatprep.subr.bf16.mxu0 0
        %584 = vmatpush1.bf16.msra.mxu0 %v561
        %585 = vmatprep.subr.bf16.mxu0 0
        %586 = vmatpush1.bf16.msra.mxu0 %v562
        %587 = vmatprep.subr.bf16.mxu0 0
        %588 = vmatpush1.bf16.msra.mxu0 0
        %589 = vmatprep.subr.bf16.mxu0 0
        %590 = vmatpush1.bf16.msra.mxu0 0
        %591 = vmatprep.subr.bf16.mxu0 0
        %592 = vmatpush1.bf16.msra.mxu0 0
        %593 = vmatprep.subr.bf16.mxu0 0
        %594 = vmatpush1.bf16.msra.mxu0 0
        %595 = vmatprep.subr.bf16.mxu0 0
        %596 = vmatpush1.bf16.msra.mxu0 0
        %597 = vmatprep.subr.bf16.mxu0 0
        %598 = vmatpush1.bf16.msra.mxu0 0
        %599 = vmatprep.subr.bf16.mxu0 0
        %600 = vmatpush1.bf16.msra.mxu0 0
        %601 = vmatprep.subr.bf16.mxu0 0
        %602 = vmatpush1.bf16.msra.mxu0 0
        %603 = vmatprep.mubr.bf16.mxu0 0
        %604 = vmatmul.mubr.bf16.gmra.mrb[0].mxu0 %v506
        %v605 = vpop.f32.mrb[0].mxu0
        %v606 = vadd.f32 0.0, %v605
        %v607 = vpop.f32.mrb[0].mxu0
        %v608 = vpop.f32.mrb[0].mxu0
        %v609 = vpop.f32.mrb[0].mxu0
        %610 = vdwg.mxu0
        %v611 = vadd.f32 %v504, %v606
        %612 = vst [vmem:[#allocation2] sm:$0xff] %v611
        %p613 = scmp.eq.s32.totalorder %s33, 1
        // Predicated region
        $region85: #{tpu_custom_call.1} parent=67 // pred_check
          %p614 = pneg %p613
        $region86: #{tpu_custom_call.1} parent=67 // pred_check_branch
          %616 = sbr.rel (%p614) target = $region88
        $region87: #{tpu_custom_call.1} parent=67 // pred_region
          %v617 = vld [vmem:[#allocation2] sm:$0xff]
          %v618 = vld [vmem:[%s2] sm:$0x1]
          %v620 = vlaneseq
          %v621 = vshrl.u32 %v620, 7
          %v622 = vsub.s32 0, %v621
          %v623 = vrot.slane %v618, %v622
          %v625 = vadd.f32 %v617, %v623
          %v626 = vmax.f32 %v625, 0.0
          %v627 = vpack.c.bf16 %v626, %v626
          %v628 = vld [vmem:[%s3] sm:$0xf]
          %v629 = vld [vmem:[%s3 + $0x4] sm:$0xf]
          %v630 = vld [vmem:[%s3 + $0x8] sm:$0xf]
          %v631 = vld [vmem:[%s3 + $0xc] sm:$0xf]
          %v632 = vld [vmem:[%s3 + $0x10] sm:$0xf]
          %v633 = vld [vmem:[%s3 + $0x14] sm:$0xf]
          %v634 = vld [vmem:[%s3 + $0x18] sm:$0xf]
          %v635 = vld [vmem:[%s3 + $0x1c] sm:$0xf]
          %v636 = vld [vmem:[%s3 + $0x20] sm:$0xf]
          %v637 = vld [vmem:[%s3 + $0x24] sm:$0xf]
          %v638 = vld [vmem:[%s3 + $0x28] sm:$0xf]
          %v639 = vld [vmem:[%s3 + $0x2c] sm:$0xf]
          %v640 = vld [vmem:[%s3 + $0x30] sm:$0xf]
          %v641 = vld [vmem:[%s3 + $0x34] sm:$0xf]
          %v642 = vld [vmem:[%s3 + $0x38] sm:$0xf]
          %v643 = vld [vmem:[%s3 + $0x3c] sm:$0xf]
          %v644 = vld [vmem:[%s4] sm:$0x1]
          %v646 = vlaneseq
          %v647 = vshrl.u32 %v646, 7
          %v648 = vsub.s32 0, %v647
          %v649 = vrot.slane %v644, %v648
          %v667 = vunpack.c.l.b16 %v628
          %v668 = vunpack.c.l.b16 %v629
          %v669 = vunpack.c.l.b16 %v630
          %v670 = vunpack.c.l.b16 %v631
          %v671 = vunpack.c.l.b16 %v632
          %v672 = vunpack.c.l.b16 %v633
          %v673 = vunpack.c.l.b16 %v634
          %v674 = vunpack.c.l.b16 %v635
          %v675 = vunpack.c.l.b16 %v636
          %v676 = vunpack.c.l.b16 %v637
          %v677 = vunpack.c.l.b16 %v638
          %v678 = vunpack.c.l.b16 %v639
          %v679 = vunpack.c.l.b16 %v640
          %v680 = vunpack.c.l.b16 %v641
          %v681 = vunpack.c.l.b16 %v642
          %v682 = vunpack.c.l.b16 %v643
          %v683 = vpack.c.b16 %v668, %v667
          %v684 = vpack.c.b16 %v670, %v669
          %v685 = vpack.c.b16 %v672, %v671
          %v686 = vpack.c.b16 %v674, %v673
          %v687 = vpack.c.b16 %v676, %v675
          %v688 = vpack.c.b16 %v678, %v677
          %v689 = vpack.c.b16 %v680, %v679
          %v690 = vpack.c.b16 %v682, %v681
          %699 = vmatprep.subr.bf16.mxu0 0
          %700 = vmatpush1.bf16.msra.mxu0 %v683
          %701 = vmatprep.subr.bf16.mxu0 0
          %702 = vmatpush1.bf16.msra.mxu0 %v684
          %703 = vmatprep.subr.bf16.mxu0 0
          %704 = vmatpush1.bf16.msra.mxu0 %v685
          %705 = vmatprep.subr.bf16.mxu0 0
          %706 = vmatpush1.bf16.msra.mxu0 %v686
          %707 = vmatprep.subr.bf16.mxu0 0
          %708 = vmatpush1.bf16.msra.mxu0 %v687
          %709 = vmatprep.subr.bf16.mxu0 0
          %710 = vmatpush1.bf16.msra.mxu0 %v688
          %711 = vmatprep.subr.bf16.mxu0 0
          %712 = vmatpush1.bf16.msra.mxu0 %v689
          %713 = vmatprep.subr.bf16.mxu0 0
          %714 = vmatpush1.bf16.msra.mxu0 %v690
          %715 = vmatprep.subr.bf16.mxu0 0
          %716 = vmatpush1.bf16.msra.mxu0 0
          %717 = vmatprep.subr.bf16.mxu0 0
          %718 = vmatpush1.bf16.msra.mxu0 0
          %719 = vmatprep.subr.bf16.mxu0 0
          %720 = vmatpush1.bf16.msra.mxu0 0
          %721 = vmatprep.subr.bf16.mxu0 0
          %722 = vmatpush1.bf16.msra.mxu0 0
          %723 = vmatprep.subr.bf16.mxu0 0
          %724 = vmatpush1.bf16.msra.mxu0 0
          %725 = vmatprep.subr.bf16.mxu0 0
          %726 = vmatpush1.bf16.msra.mxu0 0
          %727 = vmatprep.subr.bf16.mxu0 0
          %728 = vmatpush1.bf16.msra.mxu0 0
          %729 = vmatprep.subr.bf16.mxu0 0
          %730 = vmatpush1.bf16.msra.mxu0 0
          %731 = vmatprep.mubr.bf16.mxu0 0
          %732 = vmatmul.mubr.bf16.gmra.mrb[0].mxu0 %v627
          %v733 = vpop.f32.mrb[0].mxu0
          %v734 = vadd.f32 %v649, %v733
          %v735 = vpop.f32.mrb[0].mxu0
          %v736 = vpop.f32.mrb[0].mxu0
          %v737 = vpop.f32.mrb[0].mxu0
          %738 = vdwg.mxu0
          %v739 = vmax.f32 %v734, 0.0
          %v740 = vpack.c.bf16 %v739, %v739
          %v741 = vld [vmem:[#allocation8] sm:$0xff]
          %v742 = vld [vmem:[#allocation8 + $0x8] sm:$0xff]
          %v743 = vld [vmem:[#allocation8 + $0x10] sm:$0xff]
          %v744 = vld [vmem:[#allocation8 + $0x18] sm:$0xff]
          %v745 = vld [vmem:[#allocation8 + $0x20] sm:$0xff]
          %v746 = vld [vmem:[#allocation8 + $0x28] sm:$0xff]
          %v747 = vld [vmem:[#allocation8 + $0x30] sm:$0xff]
          %v748 = vld [vmem:[#allocation8 + $0x38] sm:$0xff]
          %v749 = vld [vmem:[#allocation8 + $0x40] sm:$0xff]
          %v750 = vld [vmem:[#allocation8 + $0x48] sm:$0xff]
          %v751 = vld [vmem:[#allocation8 + $0x50] sm:$0xff]
          %v752 = vld [vmem:[#allocation8 + $0x58] sm:$0xff]
          %v753 = vld [vmem:[#allocation8 + $0x60] sm:$0xff]
          %v754 = vld [vmem:[#allocation8 + $0x68] sm:$0xff]
          %v755 = vld [vmem:[#allocation8 + $0x70] sm:$0xff]
          %v756 = vld [vmem:[#allocation8 + $0x78] sm:$0xff]
          %v757 = vld [vmem:[%s6] sm:$0x3]
          %v759 = vlaneseq
          %v760 = vshrl.u32 %v759, 7
          %v761 = vsub.s32 0, %v760
          %v762 = vrot.slane %v757, %v761
          %v763 = vlaneseq
          %v764 = vshrl.u32 %v763, 7
          %v765 = vsub.s32 1, %v764
          %v766 = vrot.slane %v757, %v765
          %v785 = vunpack.c.l.b16 %v741
          %v786 = vunpack.c.h.b16 %v741
          %v787 = vunpack.c.l.b16 %v742
          %v788 = vunpack.c.h.b16 %v742
          %v789 = vunpack.c.l.b16 %v743
          %v790 = vunpack.c.h.b16 %v743
          %v791 = vunpack.c.l.b16 %v744
          %v792 = vunpack.c.h.b16 %v744
          %v793 = vunpack.c.l.b16 %v745
          %v794 = vunpack.c.h.b16 %v745
          %v795 = vunpack.c.l.b16 %v746
          %v796 = vunpack.c.h.b16 %v746
          %v797 = vunpack.c.l.b16 %v747
          %v798 = vunpack.c.h.b16 %v747
          %v799 = vunpack.c.l.b16 %v748
          %v800 = vunpack.c.h.b16 %v748
          %v801 = vunpack.c.l.b16 %v749
          %v802 = vunpack.c.h.b16 %v749
          %v803 = vunpack.c.l.b16 %v750
          %v804 = vunpack.c.h.b16 %v750
          %v805 = vunpack.c.l.b16 %v751
          %v806 = vunpack.c.h.b16 %v751
          %v807 = vunpack.c.l.b16 %v752
          %v808 = vunpack.c.h.b16 %v752
          %v809 = vunpack.c.l.b16 %v753
          %v810 = vunpack.c.h.b16 %v753
          %v811 = vunpack.c.l.b16 %v754
          %v812 = vunpack.c.h.b16 %v754
          %v813 = vunpack.c.l.b16 %v755
          %v814 = vunpack.c.h.b16 %v755
          %v815 = vunpack.c.l.b16 %v756
          %v816 = vunpack.c.h.b16 %v756
          %v817 = vpack.c.b16 %v787, %v785
          %v818 = vpack.c.b16 %v788, %v786
          %v819 = vpack.c.b16 %v791, %v789
          %v820 = vpack.c.b16 %v792, %v790
          %v821 = vpack.c.b16 %v795, %v793
          %v822 = vpack.c.b16 %v796, %v794
          %v823 = vpack.c.b16 %v799, %v797
          %v824 = vpack.c.b16 %v800, %v798
          %v825 = vpack.c.b16 %v803, %v801
          %v826 = vpack.c.b16 %v804, %v802
          %v827 = vpack.c.b16 %v807, %v805
          %v828 = vpack.c.b16 %v808, %v806
          %v829 = vpack.c.b16 %v811, %v809
          %v830 = vpack.c.b16 %v812, %v810
          %v831 = vpack.c.b16 %v815, %v813
          %v832 = vpack.c.b16 %v816, %v814
          %849 = vmatprep.subr.bf16.mxu0 %v818
          %850 = vmatpush1.bf16.msra.mxu0 %v817
          %851 = vmatprep.subr.bf16.mxu0 %v820
          %852 = vmatpush1.bf16.msra.mxu0 %v819
          %853 = vmatprep.subr.bf16.mxu0 %v822
          %854 = vmatpush1.bf16.msra.mxu0 %v821
          %855 = vmatprep.subr.bf16.mxu0 %v824
          %856 = vmatpush1.bf16.msra.mxu0 %v823
          %857 = vmatprep.subr.bf16.mxu0 %v826
          %858 = vmatpush1.bf16.msra.mxu0 %v825
          %859 = vmatprep.subr.bf16.mxu0 %v828
          %860 = vmatpush1.bf16.msra.mxu0 %v827
          %861 = vmatprep.subr.bf16.mxu0 %v830
          %862 = vmatpush1.bf16.msra.mxu0 %v829
          %863 = vmatprep.subr.bf16.mxu0 %v832
          %864 = vmatpush1.bf16.msra.mxu0 %v831
          %865 = vmatprep.subr.bf16.mxu0 0
          %866 = vmatpush1.bf16.msra.mxu0 0
          %867 = vmatprep.subr.bf16.mxu0 0
          %868 = vmatpush1.bf16.msra.mxu0 0
          %869 = vmatprep.subr.bf16.mxu0 0
          %870 = vmatpush1.bf16.msra.mxu0 0
          %871 = vmatprep.subr.bf16.mxu0 0
          %872 = vmatpush1.bf16.msra.mxu0 0
          %873 = vmatprep.subr.bf16.mxu0 0
          %874 = vmatpush1.bf16.msra.mxu0 0
          %875 = vmatprep.subr.bf16.mxu0 0
          %876 = vmatpush1.bf16.msra.mxu0 0
          %877 = vmatprep.subr.bf16.mxu0 0
          %878 = vmatpush1.bf16.msra.mxu0 0
          %879 = vmatprep.subr.bf16.mxu0 0
          %880 = vmatpush1.bf16.msra.mxu0 0
          %881 = vmatprep.mubr.bf16.mxu0 0
          %882 = vmatmul.mubr.bf16.gmra.mrb[0].mxu0 %v740
          %v883 = vpop.f32.mrb[0].mxu0
          %v884 = vadd.f32 %v762, %v883
          %v885 = vpop.f32.mrb[0].mxu0
          %v886 = vadd.f32 %v766, %v885
          %v887 = vpop.f32.mrb[0].mxu0
          %v888 = vpop.f32.mrb[0].mxu0
          %889 = vdwg.mxu0
          %890 = vst [vmem:[#allocation9] sm:$0xff] %v884
          %891 = vst [vmem:[#allocation9 + $0x8] sm:$0xff] %v886
          %v892 = vmul.f32 %v886, 1.442695
          %v893 = vpow.pop %v892
          %v894 = vld [vmem:[%s7] sm:$0xff]
          %v895 = vmul.f32 %v893, %v894
          %v896 = vadd.f32 %v884, %v895
          %v897 = vpack.c.bf16 %v896, %v896
          %v898 = vld [vmem:[%s8] sm:$0xf]
          %v899 = vld [vmem:[%s8 + $0x4] sm:$0xf]
          %v900 = vld [vmem:[%s8 + $0x8] sm:$0xf]
          %v901 = vld [vmem:[%s8 + $0xc] sm:$0xf]
          %v902 = vld [vmem:[%s8 + $0x10] sm:$0xf]
          %v903 = vld [vmem:[%s8 + $0x14] sm:$0xf]
          %v904 = vld [vmem:[%s8 + $0x18] sm:$0xf]
          %v905 = vld [vmem:[%s8 + $0x1c] sm:$0xf]
          %v906 = vld [vmem:[%s8 + $0x20] sm:$0xf]
          %v907 = vld [vmem:[%s8 + $0x24] sm:$0xf]
          %v908 = vld [vmem:[%s8 + $0x28] sm:$0xf]
          %v909 = vld [vmem:[%s8 + $0x2c] sm:$0xf]
          %v910 = vld [vmem:[%s8 + $0x30] sm:$0xf]
          %v911 = vld [vmem:[%s8 + $0x34] sm:$0xf]
          %v912 = vld [vmem:[%s8 + $0x38] sm:$0xf]
          %v913 = vld [vmem:[%s8 + $0x3c] sm:$0xf]
          %v914 = vld [vmem:[%s9] sm:$0x1]
          %v916 = vlaneseq
          %v917 = vshrl.u32 %v916, 7
          %v918 = vsub.s32 0, %v917
          %v919 = vrot.slane %v914, %v918
          %v937 = vunpack.c.l.b16 %v898
          %v938 = vunpack.c.l.b16 %v899
          %v939 = vunpack.c.l.b16 %v900
          %v940 = vunpack.c.l.b16 %v901
          %v941 = vunpack.c.l.b16 %v902
          %v942 = vunpack.c.l.b16 %v903
          %v943 = vunpack.c.l.b16 %v904
          %v944 = vunpack.c.l.b16 %v905
          %v945 = vunpack.c.l.b16 %v906
          %v946 = vunpack.c.l.b16 %v907
          %v947 = vunpack.c.l.b16 %v908
          %v948 = vunpack.c.l.b16 %v909
          %v949 = vunpack.c.l.b16 %v910
          %v950 = vunpack.c.l.b16 %v911
          %v951 = vunpack.c.l.b16 %v912
          %v952 = vunpack.c.l.b16 %v913
          %v953 = vpack.c.b16 %v938, %v937
          %v954 = vpack.c.b16 %v940, %v939
          %v955 = vpack.c.b16 %v942, %v941
          %v956 = vpack.c.b16 %v944, %v943
          %v957 = vpack.c.b16 %v946, %v945
          %v958 = vpack.c.b16 %v948, %v947
          %v959 = vpack.c.b16 %v950, %v949
          %v960 = vpack.c.b16 %v952, %v951
          %969 = vmatprep.subr.bf16.mxu0 0
          %970 = vmatpush1.bf16.msra.mxu0 %v953
          %971 = vmatprep.subr.bf16.mxu0 0
          %972 = vmatpush1.bf16.msra.mxu0 %v954
          %973 = vmatprep.subr.bf16.mxu0 0
          %974 = vmatpush1.bf16.msra.mxu0 %v955
          %975 = vmatprep.subr.bf16.mxu0 0
          %976 = vmatpush1.bf16.msra.mxu0 %v956
          %977 = vmatprep.subr.bf16.mxu0 0
          %978 = vmatpush1.bf16.msra.mxu0 %v957
          %979 = vmatprep.subr.bf16.mxu0 0
          %980 = vmatpush1.bf16.msra.mxu0 %v958
          %981 = vmatprep.subr.bf16.mxu0 0
          %982 = vmatpush1.bf16.msra.mxu0 %v959
          %983 = vmatprep.subr.bf16.mxu0 0
          %984 = vmatpush1.bf16.msra.mxu0 %v960
          %985 = vmatprep.subr.bf16.mxu0 0
          %986 = vmatpush1.bf16.msra.mxu0 0
          %987 = vmatprep.subr.bf16.mxu0 0
          %988 = vmatpush1.bf16.msra.mxu0 0
          %989 = vmatprep.subr.bf16.mxu0 0
          %990 = vmatpush1.bf16.msra.mxu0 0
          %991 = vmatprep.subr.bf16.mxu0 0
          %992 = vmatpush1.bf16.msra.mxu0 0
          %993 = vmatprep.subr.bf16.mxu0 0
          %994 = vmatpush1.bf16.msra.mxu0 0
          %995 = vmatprep.subr.bf16.mxu0 0
          %996 = vmatpush1.bf16.msra.mxu0 0
          %997 = vmatprep.subr.bf16.mxu0 0
          %998 = vmatpush1.bf16.msra.mxu0 0
          %999 = vmatprep.subr.bf16.mxu0 0
          %1000 = vmatpush1.bf16.msra.mxu0 0
          %1001 = vmatprep.mubr.bf16.mxu0 0
          %1002 = vmatmul.mubr.bf16.gmra.mrb[0].mxu0 %v897
          %v1003 = vpop.f32.mrb[0].mxu0
          %v1004 = vadd.f32 %v919, %v1003
          %v1005 = vpop.f32.mrb[0].mxu0
          %v1006 = vpop.f32.mrb[0].mxu0
          %v1007 = vpop.f32.mrb[0].mxu0
          %1008 = vdwg.mxu0
          %v1009 = vmax.f32 %v1004, 0.0
          %v1010 = vpack.c.bf16 %v1009, %v1009
          %v1011 = vld [vmem:[%s10] sm:$0xf]
          %v1012 = vld [vmem:[%s10 + $0x4] sm:$0xf]
          %v1013 = vld [vmem:[%s10 + $0x8] sm:$0xf]
          %v1014 = vld [vmem:[%s10 + $0xc] sm:$0xf]
          %v1015 = vld [vmem:[%s10 + $0x10] sm:$0xf]
          %v1016 = vld [vmem:[%s10 + $0x14] sm:$0xf]
          %v1017 = vld [vmem:[%s10 + $0x18] sm:$0xf]
          %v1018 = vld [vmem:[%s10 + $0x1c] sm:$0xf]
          %v1019 = vld [vmem:[%s11] sm:$0x1]
          %v1021 = vlaneseq
          %v1022 = vshrl.u32 %v1021, 7
          %v1023 = vsub.s32 0, %v1022
          %v1024 = vrot.slane %v1019, %v1023
          %v1034 = vunpack.c.l.b16 %v1011
          %v1035 = vunpack.c.l.b16 %v1012
          %v1036 = vunpack.c.l.b16 %v1013
          %v1037 = vunpack.c.l.b16 %v1014
          %v1038 = vunpack.c.l.b16 %v1015
          %v1039 = vunpack.c.l.b16 %v1016
          %v1040 = vunpack.c.l.b16 %v1017
          %v1041 = vunpack.c.l.b16 %v1018
          %v1042 = vpack.c.b16 %v1035, %v1034
          %v1043 = vpack.c.b16 %v1037, %v1036
          %v1044 = vpack.c.b16 %v1039, %v1038
          %v1045 = vpack.c.b16 %v1041, %v1040
          %vm1050 = vcmask 523264
          %v1052 = vsel %vm1050, %v1010, 0
          %1054 = vmatprep.subr.bf16.mxu0 0
          %1055 = vmatpush1.bf16.msra.mxu0 %v1042
          %1056 = vmatprep.subr.bf16.mxu0 0
          %1057 = vmatpush1.bf16.msra.mxu0 %v1043
          %1058 = vmatprep.subr.bf16.mxu0 0
          %1059 = vmatpush1.bf16.msra.mxu0 %v1044
          %1060 = vmatprep.subr.bf16.mxu0 0
          %1061 = vmatpush1.bf16.msra.mxu0 %v1045
          %1062 = vmatprep.subr.bf16.mxu0 0
          %1063 = vmatpush1.bf16.msra.mxu0 0
          %1064 = vmatprep.subr.bf16.mxu0 0
          %1065 = vmatpush1.bf16.msra.mxu0 0
          %1066 = vmatprep.subr.bf16.mxu0 0
          %1067 = vmatpush1.bf16.msra.mxu0 0
          %1068 = vmatprep.subr.bf16.mxu0 0
          %1069 = vmatpush1.bf16.msra.mxu0 0
          %1070 = vmatprep.subr.bf16.mxu0 0
          %1071 = vmatpush1.bf16.msra.mxu0 0
          %1072 = vmatprep.subr.bf16.mxu0 0
          %1073 = vmatpush1.bf16.msra.mxu0 0
          %1074 = vmatprep.subr.bf16.mxu0 0
          %1075 = vmatpush1.bf16.msra.mxu0 0
          %1076 = vmatprep.subr.bf16.mxu0 0
          %1077 = vmatpush1.bf16.msra.mxu0 0
          %1078 = vmatprep.subr.bf16.mxu0 0
          %1079 = vmatpush1.bf16.msra.mxu0 0
          %1080 = vmatprep.subr.bf16.mxu0 0
          %1081 = vmatpush1.bf16.msra.mxu0 0
          %1082 = vmatprep.subr.bf16.mxu0 0
          %1083 = vmatpush1.bf16.msra.mxu0 0
          %1084 = vmatprep.subr.bf16.mxu0 0
          %1085 = vmatpush1.bf16.msra.mxu0 0
          %1086 = vmatprep.mubr.bf16.mxu0 0
          %1087 = vmatmul.mubr.bf16.gmra.mrb[0].mxu0 %v1052
          %v1088 = vpop.f32.mrb[0].mxu0
          %v1089 = vadd.f32 %v1024, %v1088
          %v1090 = vpop.f32.mrb[0].mxu0
          %v1091 = vpop.f32.mrb[0].mxu0
          %v1092 = vpop.f32.mrb[0].mxu0
          %1093 = vdwg.mxu0
          %v1094 = vmax.f32 %v1089, 0.0
          %1095 = vst [vmem:[#allocation10] sm:$0xff] %v1094
        $region88: #{tpu_custom_call.1} parent=67 // pred_fallthru
          _
        // Predicated region
        $region89: #{tpu_custom_call.1} parent=67 // pred_check
          %p1096 = pneg %p308
        $region90: #{tpu_custom_call.1} parent=67 // pred_check_branch
          %1098 = sbr.rel (%p1096) target = $region92
        $region91: #{tpu_custom_call.1} parent=67 // pred_region
          %s1100 = ssub.s32 256, 256
          %1101 = vsyncadd [#allocation5], %s1100
          %s1103 = sshll.u32 [#allocation9], 4
          %s1104 = int_to_ptr.vmem [resolvable:$true] %s1103
          %1106 = dma.vmem_to_hbm [thread:$0]  %s1104, 256, %s12, [#allocation5]
        $region92: #{tpu_custom_call.1} parent=67 // pred_fallthru
          _
        // Predicated region
        $region93: #{tpu_custom_call.1} parent=67 // pred_check
          %p1107 = pneg %p329
        $region94: #{tpu_custom_call.1} parent=67 // pred_check_branch
          %1109 = sbr.rel (%p1107) target = $region96
        $region95: #{tpu_custom_call.1} parent=67 // pred_region
          %s1111 = ssub.s32 128, 128
          %1112 = vsyncadd [#allocation11], %s1111
          %s1114 = sshll.u32 [#allocation10], 4
          %s1115 = int_to_ptr.vmem [resolvable:$true] %s1114
          %1117 = dma.vmem_to_hbm [thread:$0]  %s1115, 128, %s13, [#allocation11]
        $region96: #{tpu_custom_call.1} parent=67 // pred_fallthru
          _
        // Predicated region
        $region97: #{tpu_custom_call.1} parent=67 // pred_check
          %p1118 = pneg %p308
        $region98: #{tpu_custom_call.1} parent=67 // pred_check_branch
          %1120 = sbr.rel (%p1118) target = $region100
        $region99: #{tpu_custom_call.1} parent=67 // pred_region
          %1121 = dma.done [#allocation5], 256
        $region100: #{tpu_custom_call.1} parent=67 // pred_fallthru
          _
        // Predicated region
        $region101: #{tpu_custom_call.1} parent=67 // pred_check
          %p1122 = pneg %p329
        $region102: #{tpu_custom_call.1} parent=67 // pred_check_branch
          %1124 = sbr.rel (%p1122) target = $region104
        $region103: #{tpu_custom_call.1} parent=67 // pred_region
          %1125 = dma.done [#allocation11], 128
        $region104: #{tpu_custom_call.1} parent=67 // pred_fallthru
          _
      $region68: #{tpu_custom_call.1} parent=5 // pred_fallthru
        _
      %p1126 = scmp.le.s32.totalorder 2, %s28
      // Predicated region
      $region105: #{tpu_custom_call.1} parent=5 // pred_check
        %p1127 = pneg %p1126
      $region106: #{tpu_custom_call.1} parent=5 // pred_check_branch
        %1129 = sbr.rel (%p1127) target = $region108
      $region107: #{tpu_custom_call.1} parent=5 // pred_region
        %s1130 = ssub.s32 %s28, 2
      $region108: #{tpu_custom_call.1} parent=5 // pred_fallthru
        _
    $region6: #{tpu_custom_call.1} parent=1 // loop_footer
      %s32 = sadd.s32 1, %s28
    $region7: #{tpu_custom_call.1} parent=1 // loop_footer_branch
      %27 = sbr.rel target = $region3
    $region8: #{tpu_custom_call.1} parent=1 // loop_exit
      _
    %1131 = vsyncpa [#allocation4], 1
    %s1132 = scalar_lea.sflag [#allocation4], 1
    %1133 = vsyncpa %s1132, 1
    %1134 = vsyncpa [#allocation7], 1
    %s1135 = scalar_lea.sflag [#allocation7], 1
    %1136 = vsyncpa %s1135, 1
    %1137 = vsyncpa [#allocation5], 1
    %s1138 = scalar_lea.sflag [#allocation5], 1
    %1139 = vsyncpa %s1138, 1
    %1140 = vsyncpa [#allocation11], 1

</llo_original>
